<compile_context>
chip_gen: v5e
topology: v5e:2x2
jax: 0.10.0
libtpu: 0.0.40
codegen_flags: <defaults>
</compile_context>

<pallas_src>
import functools
import math

import jax
import jax.numpy as jnp
from jax import lax
from jax.experimental import pallas as pl
from jax.experimental.pallas import tpu as pltpu

# FocalLoss hyperparameters (args.alpha, args.gamma, args.reduce)
FOCAL_ALPHA = 1.0
FOCAL_GAMMA = 2.0   # statically 2 -> implemented as an explicit square below
FOCAL_REDUCE = True


# ---------------------------------------------------------------------------
# Fused kernel: label-wise attention + per-label scoring + element-wise focal
# ---------------------------------------------------------------------------
def _fused_output_kernel(x_ref, t_ref, uw_ref, fw_ref, fb_ref, y_ref, fl_ref, *, tb):
    # x_ref : (TB, N, D)  batch tile of activations (native dtype; bf16 stays bf16)
    # t_ref : (TY, TB)    target tile (transposed in the wrapper to match outputs)
    # uw_ref: (TY, D)     U.weight tile
    # fw_ref: (TY, D)     final.weight tile
    # fb_ref: (TY, 1)     final.bias tile
    # y_ref : (TY, TB)    logits tile, stored as (Y, B); wrapper transposes to (B, Y)
    # fl_ref: (TY, TB)    per-element focal loss tile (mean taken in the wrapper)
    ty = uw_ref.shape[0]
    uw = uw_ref[...]                       # hoisted loads, native dtype for the MXU
    fw = fw_ref[...]
    lane_id = lax.broadcasted_iota(jnp.int32, (ty, tb), 1)   # hoisted (no CSE in loop)

    def body(b, scores):
        xb = x_ref[b]                      # (N, D) dynamic leading-axis index

        # att[y, n] = sum_d U[y, d] * x[n, d]  (D-contraction, no x^T materialized)
        att = lax.dot_general(uw, xb, (((1,), (1,)), ((), ())),
                              preferred_element_type=jnp.float32)      # (TY, N) f32
        att = att - jnp.max(att, axis=1, keepdims=True)
        e = jnp.exp(att)
        alpha = e * pl.reciprocal(jnp.sum(e, axis=1, keepdims=True), approx=True)

        # proj[y, n] = sum_d final.weight[y, d] * x[n, d]
        # score[y]   = sum_n alpha[y, n] * proj[y, n]
        #            = sum_d final.weight[y, d] * (alpha @ x)[y, d]
        # -> equivalent to the reference but never materializes m = alpha @ x.
        proj = lax.dot_general(fw, xb, (((1,), (1,)), ((), ())),
                               preferred_element_type=jnp.float32)     # (TY, N) f32
        col = jnp.sum(alpha * proj, axis=1, keepdims=True)             # (TY, 1)

        # Place column b (elementwise select; avoids lane-concat / narrow stores).
        return jnp.where(lane_id == b, col, scores)

    scores = lax.fori_loop(0, tb, body, jnp.zeros((ty, tb), jnp.float32))

    logits = scores + fb_ref[...].astype(jnp.float32)                  # (TY, TB) f32
    y_ref[...] = logits.astype(y_ref.dtype)

    # Fused FocalLoss (element-wise, fp32). Stable bce_with_logits:
    t = t_ref[...].astype(jnp.float32)
    bce = jnp.maximum(logits, 0.0) - logits * t + jnp.log1p(jnp.exp(-jnp.abs(logits)))
    one_m_pt = 1.0 - jnp.exp(-bce)                                     # 1 - pt
    fl_ref[...] = (FOCAL_ALPHA * one_m_pt * one_m_pt * bce).astype(fl_ref.dtype)


# ---------------------------------------------------------------------------
# Wrapper
# ---------------------------------------------------------------------------
def _choose_tile(total, preferred):
    if total <= preferred:
        return total
    return preferred if total % preferred == 0 else total


def output_layer_forward(x, target, u_weight, f_weight, f_bias, *, tb=None, ty=None):
    """x: (B, N, D), target: (B, Y), u_weight/f_weight: (Y, D), f_bias: (Y,)."""
    B, N, D = x.shape
    Y = u_weight.shape[0]

    # Batch tile (amortize ~0.35us/step overhead) and label tile (bound VMEM).
    # Per step the operands are 2*TY*D (weights) + TB*N*D (x, resident across
    # label tiles) plus two (TY, N) fp32 intermediates live at once inside the
    # fori_loop -> comfortably under the default scoped-VMEM budget.
    tb = _choose_tile(B, 8) if tb is None else tb
    ty = _choose_tile(Y, 128) if ty is None else ty
    assert B % tb == 0 and Y % ty == 0

    target_t = target.T                     # (Y, B)  — wrapper-side layout plumbing
    f_bias2d = f_bias.reshape(Y, 1)

    kernel = functools.partial(_fused_output_kernel, tb=tb)

    y_t, focal = pl.pallas_call(
        kernel,
        out_shape=(jax.ShapeDtypeStruct((Y, B), jnp.float32),
                   jax.ShapeDtypeStruct((Y, B), jnp.float32)),
        grid_spec=pltpu.PrefetchScalarGridSpec(
            num_scalar_prefetch=0,
            # Label axis innermost (fastest varying): x block index is constant
            # across it, so the big activation tile is DMA'd once per batch tile.
            grid=(B // tb, Y // ty),
            in_specs=[
                pl.BlockSpec((tb, N, D), lambda bi, yi: (bi, 0, 0)),   # x
                pl.BlockSpec((ty, tb), lambda bi, yi: (yi, bi)),       # target^T
                pl.BlockSpec((ty, D), lambda bi, yi: (yi, 0)),         # U.weight
                pl.BlockSpec((ty, D), lambda bi, yi: (yi, 0)),         # final.weight
                pl.BlockSpec((ty, 1), lambda bi, yi: (yi, 0)),         # final.bias
            ],
            out_specs=[
                pl.BlockSpec((ty, tb), lambda bi, yi: (yi, bi)),       # logits (Y, B)
                pl.BlockSpec((ty, tb), lambda bi, yi: (yi, bi)),       # focal elems
            ],
        ),
        compiler_params=pltpu.CompilerParams(
            dimension_semantics=("parallel", "parallel")),
    )(x, target_t, u_weight, f_weight, f_bias2d)

    y = y_t.T                               # (B, Y)
    loss = jnp.mean(focal)                  # FocalLoss(reduce=True): mean over B*Y
    # TODO(synk): the reduce=False path of the reference returns an undefined
    # name (Focal_los); only the reduce=True path is implemented.
    return y, loss


# ---------------------------------------------------------------------------
# Pure-JAX reference (for a correctness sanity check)
# ---------------------------------------------------------------------------
def _reference_forward(x, target, u_weight, f_weight, f_bias):
    att = jnp.einsum('yd,bnd->byn', u_weight, x)
    alpha = jax.nn.softmax(att, axis=2)
    m = jnp.einsum('byn,bnd->byd', alpha, x)
    y = jnp.sum(f_weight[None] * m, axis=2) + f_bias[None]
    bce = jnp.maximum(y, 0.0) - y * target + jnp.log1p(jnp.exp(-jnp.abs(y)))
    pt = jnp.exp(-bce)
    loss = jnp.mean(FOCAL_ALPHA * (1.0 - pt) ** FOCAL_GAMMA * bce)
    return y, loss


# ---------------------------------------------------------------------------
# Deterministic parameter init (xavier_uniform_ for weights, as in __init__)
# ---------------------------------------------------------------------------
def init_params(key, Y, input_size):
    k_u, k_f, k_b = jax.random.split(key, 3)
    bound = math.sqrt(6.0 / (input_size + Y))          # xavier_uniform_ gain=1
    u_weight = jax.random.uniform(k_u, (Y, input_size), jnp.float32, -bound, bound)
    f_weight = jax.random.uniform(k_f, (Y, input_size), jnp.float32, -bound, bound)
    b_bound = 1.0 / math.sqrt(input_size)              # default nn.Linear bias init
    f_bias = jax.random.uniform(k_b, (Y,), jnp.float32, -b_bound, b_bound)
    return u_weight, f_weight, f_bias


if __name__ == "__main__":
    B, N, D, Y = 2, 8, 32, 4   # batch, seq, input_size, num labels

    key = jax.random.PRNGKey(0)
    k_x, k_t, k_p = jax.random.split(key, 3)

    x = jax.random.normal(k_x, (B, N, D), jnp.float32)
    target = jax.random.bernoulli(k_t, 0.3, (B, Y)).astype(jnp.float32)
    u_weight, f_weight, f_bias = init_params(k_p, Y, D)

    y, loss = jax.jit(output_layer_forward)(x, target, u_weight, f_weight, f_bias)
    jax.block_until_ready((y, loss))

    y_ref, loss_ref = _reference_forward(x, target, u_weight, f_weight, f_bias)

    assert y.shape == (B, Y) and loss.shape == ()
    assert bool(jnp.all(jnp.isfinite(y))) and bool(jnp.isfinite(loss))
    assert float(jnp.max(jnp.abs(y - y_ref))) < 5e-2
    assert abs(float(loss) - float(loss_ref)) < 5e-2
    print("KERNEL_OK")
</pallas_src>

<mosaic_0001>
module attributes {stable_mosaic.version = 11 : i64} {
  func.func @_fused_output_kernel(%arg0: i32, %arg1: i32, %arg2: memref<2x8x32xf32, #tpu.memory_space<vmem>>, %arg3: memref<4x2xf32, #tpu.memory_space<vmem>>, %arg4: memref<4x32xf32, #tpu.memory_space<vmem>>, %arg5: memref<4x32xf32, #tpu.memory_space<vmem>>, %arg6: memref<4x1xf32, #tpu.memory_space<vmem>>, %arg7: memref<4x2xf32, #tpu.memory_space<vmem>>, %arg8: memref<4x2xf32, #tpu.memory_space<vmem>>) attributes {dimension_semantics = [#tpu.dimension_semantics<parallel>, #tpu.dimension_semantics<parallel>], iteration_bounds = array<i64: 1, 1>, scalar_prefetch = 0 : i64, scratch_operands = 0 : i64, tpu.core_type = #tpu.core_type<tc>, window_params = [{transform_indices = @transform_0, window_bounds = array<i64: 2, 8, 32>}, {transform_indices = @transform_1, window_bounds = array<i64: 4, 2>}, {transform_indices = @transform_2, window_bounds = array<i64: 4, 32>}, {transform_indices = @transform_3, window_bounds = array<i64: 4, 32>}, {transform_indices = @transform_4, window_bounds = array<i64: 4, 1>}, {transform_indices = @transform_5, window_bounds = array<i64: 4, 2>}, {transform_indices = @transform_6, window_bounds = array<i64: 4, 2>}]} {
    %c0 = arith.constant 0 : index
    %c0_0 = arith.constant 0 : index
    %0 = vector.load %arg4[%c0, %c0_0] : memref<4x32xf32, #tpu.memory_space<vmem>>, vector<4x32xf32>
    %c0_1 = arith.constant 0 : index
    %c0_2 = arith.constant 0 : index
    %1 = vector.load %arg5[%c0_1, %c0_2] : memref<4x32xf32, #tpu.memory_space<vmem>>, vector<4x32xf32>
    %2 = tpu.iota {dimensions = array<i32: 1>} : vector<4x2xi32>
    %cst = arith.constant 0.000000e+00 : f32
    %3 = vector.broadcast %cst : f32 to vector<4x2xf32>
    %c0_i32 = arith.constant 0 : i32
    %c2_i32 = arith.constant 2 : i32
    %4 = arith.addi %c0_i32, %c2_i32 : i32
    %c1_i32 = arith.constant 1 : i32
    %5 = scf.for %arg9 = %c0_i32 to %4 step %c1_i32 iter_args(%arg10 = %3) -> (vector<4x2xf32>)  : i32 {
      %31 = arith.index_cast %arg9 : i32 to index
      %c0_17 = arith.constant 0 : index
      %c0_18 = arith.constant 0 : index
      %32 = vector.load %arg2[%31, %c0_17, %c0_18] : memref<2x8x32xf32, #tpu.memory_space<vmem>>, vector<1x8x32xf32>
      %33 = vector.shape_cast %32 : vector<1x8x32xf32> to vector<8x32xf32>
      %cst_19 = arith.constant dense<0.000000e+00> : vector<4x8xf32>
      %34 = tpu.matmul %0, %33, %cst_19 {dimension_numbers = #tpu.dot_dimension_numbers<[1], [1], [0], [0], [0, 0, 1, 0], [], []>} : vector<4x32xf32>, vector<8x32xf32>, vector<4x8xf32> -> vector<4x8xf32>
      %cst_20 = arith.constant dense<0xFF800000> : vector<4xf32>
      %35 = vector.multi_reduction <maximumf>, %34, %cst_20 [1] : vector<4x8xf32> to vector<4xf32>
      %36 = vector.shape_cast %35 : vector<4xf32> to vector<4x1xf32>
      %37 = vector.broadcast %36 : vector<4x1xf32> to vector<4x8xf32>
      %38 = arith.subf %34, %37 : vector<4x8xf32>
      %39 = math.exp %38 : vector<4x8xf32>
      %cst_21 = arith.constant dense<0.000000e+00> : vector<4xf32>
      %40 = vector.multi_reduction <add>, %39, %cst_21 [1] : vector<4x8xf32> to vector<4xf32>
      %41 = vector.shape_cast %40 : vector<4xf32> to vector<4x1xf32>
      %42 = tpu.reciprocal %41 {approx = true} : vector<4x1xf32> -> vector<4x1xf32>
      %43 = vector.broadcast %42 : vector<4x1xf32> to vector<4x8xf32>
      %44 = arith.mulf %39, %43 : vector<4x8xf32>
      %cst_22 = arith.constant dense<0.000000e+00> : vector<4x8xf32>
      %45 = tpu.matmul %1, %33, %cst_22 {dimension_numbers = #tpu.dot_dimension_numbers<[1], [1], [0], [0], [0, 0, 1, 0], [], []>} : vector<4x32xf32>, vector<8x32xf32>, vector<4x8xf32> -> vector<4x8xf32>
      %46 = arith.mulf %44, %45 : vector<4x8xf32>
      %cst_23 = arith.constant dense<0.000000e+00> : vector<4xf32>
      %47 = vector.multi_reduction <add>, %46, %cst_23 [1] : vector<4x8xf32> to vector<4xf32>
      %48 = vector.shape_cast %47 : vector<4xf32> to vector<4x1xf32>
      %49 = vector.broadcast %arg9 : i32 to vector<4x2xi32>
      %50 = arith.cmpi eq, %2, %49 : vector<4x2xi32>
      %51 = vector.shape_cast %48 : vector<4x1xf32> to vector<4x1xf32>
      %52 = vector.broadcast %51 : vector<4x1xf32> to vector<4x2xf32>
      %53 = arith.select %50, %52, %arg10 : vector<4x2xi1>, vector<4x2xf32>
      scf.yield %53 : vector<4x2xf32>
    }
    %c2_i32_3 = arith.constant 2 : i32
    %c0_4 = arith.constant 0 : index
    %c0_5 = arith.constant 0 : index
    %6 = vector.load %arg6[%c0_4, %c0_5] : memref<4x1xf32, #tpu.memory_space<vmem>>, vector<4x1xf32>
    %7 = vector.broadcast %6 : vector<4x1xf32> to vector<4x2xf32>
    %8 = arith.addf %5, %7 : vector<4x2xf32>
    %c0_6 = arith.constant 0 : index
    %c0_7 = arith.constant 0 : index
    %9 = vector.load %arg7[%c0_6, %c0_7] : memref<4x2xf32, #tpu.memory_space<vmem>>, vector<4x2xf32>
    tpu.vector_store %arg7[%c0_6, %c0_7], %8 {strides = array<i32>} : memref<4x2xf32, #tpu.memory_space<vmem>>, vector<4x2xf32>,
    %c0_8 = arith.constant 0 : index
    %c0_9 = arith.constant 0 : index
    %10 = vector.load %arg3[%c0_8, %c0_9] : memref<4x2xf32, #tpu.memory_space<vmem>>, vector<4x2xf32>
    %cst_10 = arith.constant 0.000000e+00 : f32
    %11 = vector.broadcast %cst_10 : f32 to vector<4x2xf32>
    %12 = arith.maximumf %8, %11 : vector<4x2xf32>
    %13 = arith.mulf %8, %10 : vector<4x2xf32>
    %14 = arith.subf %12, %13 : vector<4x2xf32>
    %15 = math.absf %8 : vector<4x2xf32>
    %cst_11 = arith.constant 0.000000e+00 : f32
    %16 = vector.broadcast %cst_11 : f32 to vector<4x2xf32>
    %17 = arith.subf %16, %15 : vector<4x2xf32>
    %18 = math.exp %17 : vector<4x2xf32>
    %19 = math.log1p %18 : vector<4x2xf32>
    %20 = arith.addf %14, %19 : vector<4x2xf32>
    %cst_12 = arith.constant 0.000000e+00 : f32
    %21 = vector.broadcast %cst_12 : f32 to vector<4x2xf32>
    %22 = arith.subf %21, %20 : vector<4x2xf32>
    %23 = math.exp %22 : vector<4x2xf32>
    %cst_13 = arith.constant 1.000000e+00 : f32
    %24 = vector.broadcast %cst_13 : f32 to vector<4x2xf32>
    %25 = arith.subf %24, %23 : vector<4x2xf32>
    %cst_14 = arith.constant 1.000000e+00 : f32
    %26 = vector.broadcast %cst_14 : f32 to vector<4x2xf32>
    %27 = arith.mulf %26, %25 : vector<4x2xf32>
    %28 = arith.mulf %27, %25 : vector<4x2xf32>
    %29 = arith.mulf %28, %20 : vector<4x2xf32>
    %c0_15 = arith.constant 0 : index
    %c0_16 = arith.constant 0 : index
    %30 = vector.load %arg8[%c0_15, %c0_16] : memref<4x2xf32, #tpu.memory_space<vmem>>, vector<4x2xf32>
    tpu.vector_store %arg8[%c0_15, %c0_16], %29 {strides = array<i32>} : memref<4x2xf32, #tpu.memory_space<vmem>>, vector<4x2xf32>,
    return
  }
  func.func @transform_0(%arg0: i32, %arg1: i32) -> (i32, i32, i32) {
    %c0_i32 = arith.constant 0 : i32
    %c0_i32_0 = arith.constant 0 : i32
    %c0_i32_1 = arith.constant 0 : i32
    return %arg0, %c0_i32, %c0_i32_0 : i32, i32, i32
  }
  func.func @transform_1(%arg0: i32, %arg1: i32) -> (i32, i32) {
    %c0_i32 = arith.constant 0 : i32
    return %arg1, %arg0 : i32, i32
  }
  func.func @transform_2(%arg0: i32, %arg1: i32) -> (i32, i32) {
    %c0_i32 = arith.constant 0 : i32
    %c0_i32_0 = arith.constant 0 : i32
    return %arg1, %c0_i32 : i32, i32
  }
  func.func @transform_3(%arg0: i32, %arg1: i32) -> (i32, i32) {
    %c0_i32 = arith.constant 0 : i32
    %c0_i32_0 = arith.constant 0 : i32
    return %arg1, %c0_i32 : i32, i32
  }
  func.func @transform_4(%arg0: i32, %arg1: i32) -> (i32, i32) {
    %c0_i32 = arith.constant 0 : i32
    %c0_i32_0 = arith.constant 0 : i32
    return %arg1, %c0_i32 : i32, i32
  }
  func.func @transform_5(%arg0: i32, %arg1: i32) -> (i32, i32) {
    %c0_i32 = arith.constant 0 : i32
    return %arg1, %arg0 : i32, i32
  }
  func.func @transform_6(%arg0: i32, %arg1: i32) -> (i32, i32) {
    %c0_i32 = arith.constant 0 : i32
    return %arg1, %arg0 : i32, i32
  }
}

</mosaic_0001>

<llo_original>
// kernel: output_layer_forward.1
$region0: #{output_layer_forward.1}
  #allocation0 [shape = 'u32[]', space=smem, size = 0x4, offset = 0x4, fixed_abs, tag = 'smem constant byte address 0x4 - core index']
  #allocation1 [shape = 'u32[72,128]{1,0:T(1,128)}', space=vmem, size = 0x9000, scoped, tag = 'internal scratch']
  %s0 = inlined_call_operand.hbm [shape: f32[2,8,32], index: 0, kind: input, shape index: {}]
  %s1 = inlined_call_operand.vmem [shape: f32[4,2], index: 1, kind: input, shape index: {}]
  %s2 = inlined_call_operand.vmem [shape: f32[4,32], index: 2, kind: input, shape index: {}]
  %s3 = inlined_call_operand.vmem [shape: f32[4,32], index: 3, kind: input, shape index: {}]
  %s4 = inlined_call_operand.vmem [shape: f32[4,1], index: 4, kind: input, shape index: {}]
  %s5 = inlined_call_operand.vmem [shape: f32[4,2], index: 5, kind: output, shape index: {0}]
  %s6 = inlined_call_operand.vmem [shape: f32[4,2], index: 6, kind: output, shape index: {1}]
  %7 = xla_tuple %s5, %s6
  %s8 = sld [smem:[#allocation0]]
  $region49: #{output_layer_forward.1} parent=0
    _
  %s10 = ssub.s32 1, %s8
  %s11 = scalar_select 0, %s10, %s8
  $region1: #{output_layer_forward.1} parent=0
    #allocation2 [shape = 'u8[8192]{0}', space=vmem, size = 0x2000, scoped, tag = 'input window, operand 0, single buffered']
    #allocation3 [shape = 's32[1]{0}', space=sflag, size = 0x4, scoped, tag = 'scoped memory for output_layer_forward.1']
    %12 = vsyncpa [#allocation3], 0
    // Predicated region
    $region2: #{output_layer_forward.1} parent=1 // pred_check
      _
    $region3: #{output_layer_forward.1} parent=1 // pred_check_branch
      %14 = sbr.rel (0) target = $region5
    $region4: #{output_layer_forward.1} parent=1 // pred_region
      %16 = vsyncadd [#allocation3], 0
      %s17 = sshll.u32 %s0, 4
      %s18 = int_to_ptr.hbm [resolvable:$true] %s17
      %s19 = sshll.u32 [#allocation2], 4
      %s20 = int_to_ptr.vmem [resolvable:$true] %s19
      %25 = dma.hbm_to_vmem [thread:$0]  %s18, 256, %s20, [#allocation3], 128, 128, 8
    $region5: #{output_layer_forward.1} parent=1 // pred_fallthru
      _
    // Predicated region
    $region6: #{output_layer_forward.1} parent=1 // pred_check
      _
    $region7: #{output_layer_forward.1} parent=1 // pred_check_branch
      %27 = sbr.rel (0) target = $region9
    $region8: #{output_layer_forward.1} parent=1 // pred_region
      _
    $region9: #{output_layer_forward.1} parent=1 // pred_fallthru
      _
    // Predicated region
    $region10: #{output_layer_forward.1} parent=1 // pred_check
      _
    $region11: #{output_layer_forward.1} parent=1 // pred_check_branch
      %29 = sbr.rel (0) target = $region13
    $region12: #{output_layer_forward.1} parent=1 // pred_region
      _
    $region13: #{output_layer_forward.1} parent=1 // pred_fallthru
      _
    // Predicated region
    $region14: #{output_layer_forward.1} parent=1 // pred_check
      _
    $region15: #{output_layer_forward.1} parent=1 // pred_check_branch
      %31 = sbr.rel (0) target = $region17
    $region16: #{output_layer_forward.1} parent=1 // pred_region
      _
    $region17: #{output_layer_forward.1} parent=1 // pred_fallthru
      _
    // Predicated region
    $region18: #{output_layer_forward.1} parent=1 // pred_check
      _
    $region19: #{output_layer_forward.1} parent=1 // pred_check_branch
      %33 = sbr.rel (0) target = $region21
    $region20: #{output_layer_forward.1} parent=1 // pred_region
      _
    $region21: #{output_layer_forward.1} parent=1 // pred_fallthru
      _
    // Predicated region
    $region22: #{output_layer_forward.1} parent=1 // pred_check
      _
    $region23: #{output_layer_forward.1} parent=1 // pred_check_branch
      %35 = sbr.rel (0) target = $region25
    $region24: #{output_layer_forward.1} parent=1 // pred_region
      %37 = dma.done [#allocation3], 256
    $region25: #{output_layer_forward.1} parent=1 // pred_fallthru
      _
    %v38 = vld [vmem:[%s2] sm:$0xf]
    %v39 = vld [vmem:[%s3] sm:$0xf]
    %v40 = vlaneseq
    %v41 = vand.u32 %v40, 127
    loop: start=0, step=1, limit=2
    $region26: #{output_layer_forward.1} parent=1 // loop_pre_header
      _
    $region27: #{output_layer_forward.1} parent=1 // loop_header
      %s43 = sphi 0, %s47
      %p44 = scmp.ge.s32.totalorder %s43, 2
      %v48 = vphi 0.0, %v120
    $region28: #{output_layer_forward.1} parent=1 // loop_header_branch
      %46 = sbr.rel (%p44) target = $region32
    $region29: #{output_layer_forward.1} parent=1 // loop_body
      %s49 = smul.u32 %s43, 8
      %s50 = scalar_lea.vmem [#allocation2], %s49
      %v51 = vld [vmem:[%s50] sm:$0xff]
      %vm52 = vcmask 261120
      %v54 = vsel %vm52, %v38, 0
      %v57 = vsel %vm52, %v51, 0
      %59 = vmatpush.xpose.msra.mxu0 0.0
      %60 = vmatpush.xpose.msra.mxu0 0.0
      %61 = vmatpush.xpose.msra.mxu0 0.0
      %62 = vmatpush.xpose.msra.mxu0 0.0
      %63 = vmatpush.xpose.msra.mxu0 0.0
      %64 = vmatpush.xpose.msra.mxu0 0.0
      %65 = vmatpush.xpose.msra.mxu0 0.0
      %66 = vmatpush.xpose.msra.mxu0 0.0
      %67 = vmatpush.xpose.msra.mxu0 0.0
      %68 = vmatpush.xpose.msra.mxu0 0.0
      %69 = vmatpush.xpose.msra.mxu0 0.0
      %70 = vmatpush.xpose.msra.mxu0 0.0
      %71 = vmatpush.xpose.msra.mxu0 0.0
      %72 = vmatpush.xpose.msra.mxu0 0.0
      %73 = vmatpush.xpose.msra.mxu0 0.0
      %74 = vmatpush.xpose.msra.mxu0 %v57
      %75 = vmatmul.f32.gmra.mxu0 %v54
      %v76 = vpop.f32.mrf.mxu0
      %v77 = vadd.f32 0.0, %v76
      %78 = vdwg.mxu0
      %vm79 = vcmask 60416
      %v80 = vsel %vm79, %v77, -inf
      %81 = vmax.xlane.f32.xlu0 %v80
      %v82 = vpop.xlane.xlu0 %81
      %v83 = vsub.f32 %v77, %v82
      %v84 = vmul.f32 %v83, 1.442695
      %v85 = vpow.pop %v84
      %v86 = vsel %vm79, %v85, 0.0
      %87 = vadd.xlane.f32.xlu0 %v86
      %v88 = vpop.xlane.xlu0 %87
      %v89 = vrcp.pop %v88
      %v90 = vmul.f32 %v85, %v89
      %v92 = vsel %vm52, %v39, 0
      %94 = vmatpush.xpose.msra.mxu0 0.0
      %95 = vmatpush.xpose.msra.mxu0 0.0
      %96 = vmatpush.xpose.msra.mxu0 0.0
      %97 = vmatpush.xpose.msra.mxu0 0.0
      %98 = vmatpush.xpose.msra.mxu0 0.0
      %99 = vmatpush.xpose.msra.mxu0 0.0
      %100 = vmatpush.xpose.msra.mxu0 0.0
      %101 = vmatpush.xpose.msra.mxu0 0.0
      %102 = vmatpush.xpose.msra.mxu0 0.0
      %103 = vmatpush.xpose.msra.mxu0 0.0
      %104 = vmatpush.xpose.msra.mxu0 0.0
      %105 = vmatpush.xpose.msra.mxu0 0.0
      %106 = vmatpush.xpose.msra.mxu0 0.0
      %107 = vmatpush.xpose.msra.mxu0 0.0
      %108 = vmatpush.xpose.msra.mxu0 0.0
      %109 = vmatpush.xpose.msra.mxu0 %v57
      %110 = vmatmul.f32.gmra.mxu0 %v92
      %v111 = vpop.f32.mrf.mxu0
      %v112 = vadd.f32 0.0, %v111
      %113 = vdwg.mxu0
      %v114 = vmul.f32 %v90, %v112
      %v115 = vsel %vm79, %v114, 0.0
      %116 = vadd.xlane.f32.xlu0 %v115
      %v117 = vpop.xlane.xlu0 %116
      %v118 = vstv %s43
      %vm119 = vcmp.eq.s32.totalorder %v41, %v118
      %v120 = vsel %vm119, %v117, %v48
    $region30: #{output_layer_forward.1} parent=1 // loop_footer
      %s47 = sadd.s32 1, %s43
    $region31: #{output_layer_forward.1} parent=1 // loop_footer_branch
      %42 = sbr.rel target = $region27
    $region32: #{output_layer_forward.1} parent=1 // loop_exit
      _
    %v121 = vld [vmem:[%s4] sm:$0xf]
    %123 = vset.pattern.permute.xlu0 0
    %124 = vperm.xlu0 %123, %v121
    %v125 = vpop.permute.xlu0 %124
    %v127 = vadd.f32 %v48, %v125
    %vm128 = vcmask 11264
    %129 = vst.msk [vmem:[%s5] sm:$0xf] %vm128, %v127
    %v130 = vld [vmem:[%s1] sm:$0xf]
    %v131 = vmax.f32 %v127, 0.0
    %v132 = vmul.f32 %v127, %v130
    %v133 = vsub.f32 %v131, %v132
    %v134 = vand.u32 2147483647, %v127
    %v135 = vsub.f32 0.0, %v134
    %v136 = vmul.f32 %v135, 1.442695
    %v137 = vpow.pop %v136
    %v138 = vadd.f32 %v137, 1.0
    %v139 = vlog2.pop %v138
    %v140 = vmul.f32 %v139, 0.6931472
    %v141 = vmul.f32 -0.5, %v137
    %v142 = vadd.f32 %v141, 1.0
    %v143 = vmul.f32 %v142, %v137
    %v144 = vand.u32 2147483647, %v137
    %vm145 = vcmp.lt.f32.partialorder %v144, 0.0004427343
    %v146 = vsel %vm145, %v143, %v140
    %v147 = vadd.f32 %v133, %v146
    %v148 = vsub.f32 0.0, %v147
    %v149 = vmul.f32 %v148, 1.442695
    %v150 = vpow.pop %v149
    %v151 = vsub.f32 1.0, %v150
    %v152 = vmul.f32 %v151, %v151
    %v153 = vmul.f32 %v152, %v147
    %154 = vst.msk [vmem:[%s6] sm:$0xf] %vm128, %v153
    // Predicated region
    $region33: #{output_layer_forward.1} parent=1 // pred_check
      _
    $region34: #{output_layer_forward.1} parent=1 // pred_check_branch
      %156 = sbr.rel (0) target = $region36
    $region35: #{output_layer_forward.1} parent=1 // pred_region
      _
    $region36: #{output_layer_forward.1} parent=1 // pred_fallthru
      _
    // Predicated region
    $region37: #{output_layer_forward.1} parent=1 // pred_check
      _
    $region38: #{output_layer_forward.1} parent=1 // pred_check_branch
      %158 = sbr.rel (0) target = $region40
    $region39: #{output_layer_forward.1} parent=1 // pred_region
      _
    $region40: #{output_layer_forward.1} parent=1 // pred_fallthru
      _
    // Predicated region
    $region41: #{output_layer_forward.1} parent=1 // pred_check
      _
    $region42: #{output_layer_forward.1} parent=1 // pred_check_branch
      %160 = sbr.rel (0) target = $region44
    $region43: #{output_layer_forward.1} parent=1 // pred_region
      _
    $region44: #{output_layer_forward.1} parent=1 // pred_fallthru
      _
    // Predicated region
    $region45: #{output_layer_forward.1} parent=1 // pred_check
      _
    $region46: #{output_layer_forward.1} parent=1 // pred_check_branch
      %162 = sbr.rel (0) target = $region48
    $region47: #{output_layer_forward.1} parent=1 // pred_region
      _
    $region48: #{output_layer_forward.1} parent=1 // pred_fallthru
      _
    %163 = vsyncpa [#allocation3], 1

</llo_original>
